<compile_context>
chip_gen: v7x
topology: tpu7x:2x2x1
jax: 0.10.0
libtpu: 0.0.40
codegen_flags: <defaults>
</compile_context>

<pallas_src>
import functools

import jax
import jax.numpy as jnp
from jax.experimental import pallas as pl
from jax.experimental.pallas import tpu as pltpu

LANE = 128
SUBLANE = 8


def _round_up(x, m):
    return (x + m - 1) // m * m


def squeeze_last_dim(x):
    # Mirrors the PyTorch helper: (B, L, 1) -> (B, L)
    if x.ndim == 3 and x.shape[-1] == 1:
        return x[..., 0]
    return x


def block_kernel(x_ref, w1_ref, wmid_ref, b_ref, o_ref):
    """Fused 4-layer MLP with ReLU.

    x_ref    : (tile_b, L)        f32   (L unpadded, e.g. 10)
    w1_ref   : (L, u_pad)         compute dtype (f32 or bf16)
    wmid_ref : (3, u_pad, u_pad)  compute dtype  (fc2, fc3, fc4 stacked)
    b_ref    : (4, u_pad)         f32            (b1..b4 stacked)
    o_ref    : (tile_b, units)    f32            (units may be < u_pad)

    Dots run on the MXU in the weights' dtype with f32 accumulation; bias-add
    and ReLU run in f32 on the VPU (safe on v5e which has no bf16 VPU path).
    """
    cd = w1_ref.dtype
    biases = b_ref[...]                                    # (4, u_pad) f32

    h = jnp.dot(x_ref[...].astype(cd), w1_ref[...],
                preferred_element_type=jnp.float32)
    h = jnp.maximum(h + biases[0:1, :], 0.0)

    for layer in range(3):                                 # fc2, fc3, fc4
        h = jnp.dot(h.astype(cd), wmid_ref[layer],
                    preferred_element_type=jnp.float32)
        h = jnp.maximum(h + biases[layer + 1:layer + 2, :], 0.0)

    # units == u_pad when units is already a multiple of 128 (lane-dense
    # store); otherwise a masked store of the first `units` lanes — still far
    # cheaper than an extra HBM->HBM slice pass.
    o_ref[...] = h[:, : o_ref.shape[1]].astype(o_ref.dtype)


def prepare_block_params(params, compute_dtype=jnp.bfloat16):
    """One-time parameter prep (hoisted out of the forward path):
      * transpose PyTorch (out, in) -> (in, out)
      * fc1 weight stays UNPADDED along its contraction dim (L)
      * hidden dims zero-padded to a multiple of 128 lanes
      * fc2/fc3/fc4 stacked into one (3, u_pad, u_pad) array
      * all biases packed into one (4, u_pad) f32 array
      * weights cast to the MXU compute dtype (bf16 by default; f32 optional)
    Zero padding stays exactly 0 through every bias-add + ReLU, so results are
    unaffected.
    """
    units = params["w2"].shape[0]
    L = params["w1"].shape[1]
    u_pad = _round_up(units, LANE)

    def prep_w(w, rows_pad, cols_pad):
        wt = jnp.asarray(w, jnp.float32).T                 # (in, out)
        wt = jnp.pad(wt, ((0, rows_pad - wt.shape[0]),
                          (0, cols_pad - wt.shape[1])))
        return wt.astype(compute_dtype)

    def prep_b(b):
        bb = jnp.asarray(b, jnp.float32)
        return jnp.pad(bb, (0, u_pad - bb.shape[0]))

    w1 = prep_w(params["w1"], L, u_pad)                    # (L, u_pad)
    wmid = jnp.stack([prep_w(params[f"w{k}"], u_pad, u_pad)
                      for k in (2, 3, 4)])                 # (3, u_pad, u_pad)
    b_all = jnp.stack([prep_b(params[f"b{k}"])
                       for k in (1, 2, 3, 4)])             # (4, u_pad) f32

    arrays = tuple(jax.device_put(a) for a in (w1, wmid, b_all))
    return {"arrays": arrays, "units": units, "backcast_length": L}


@functools.partial(jax.jit, static_argnames=("units", "tile_b_max"))
def _block_forward_impl(x, w1, wmid, b_all, *, units, tile_b_max):
    x = squeeze_last_dim(x).astype(jnp.float32)
    B, L = x.shape
    u_pad = w1.shape[1]

    # --- grid / tile selection -------------------------------------------
    # >= 2 grid steps whenever B is big enough so v7x's 2 TensorCores both get
    # work; tile rows are a multiple of 8 sublanes; batch padding waste is at
    # most (n_steps * 7) rows instead of (tile_b - 1).
    n_steps = max(pl.cdiv(B, tile_b_max), 2 if B >= 2 * SUBLANE else 1)
    tile_b = _round_up(pl.cdiv(B, n_steps), SUBLANE)
    b_pad = n_steps * tile_b
    if b_pad != B:
        x = jnp.pad(x, ((0, b_pad - B), (0, 0)))           # batch pad only

    # --- VMEM budget -------------------------------------------------------
    # Weights (double-buffered), sublane-padded bias tile, double-buffered
    # x/out tiles, f32 inter-layer activations; 2x headroom; clamp to 48 MiB
    # (safely below v7x's 64 MiB physical per-TC VMEM).
    wd = jnp.dtype(w1.dtype).itemsize
    weight_bytes = (L * u_pad + 3 * u_pad * u_pad) * wd
    bias_bytes = _round_up(4, SUBLANE) * u_pad * 4
    io_tile_bytes = tile_b * (L + units) * 4
    act_bytes = 4 * tile_b * u_pad * 4
    need = 2 * (weight_bytes + bias_bytes + io_tile_bytes) + act_bytes
    vmem_limit = int(min(48 * 1024 * 1024,
                         max(16 * 1024 * 1024, 2 * need)))

    const2 = lambda i: (0, 0)

    out = pl.pallas_call(
        block_kernel,
        out_shape=jax.ShapeDtypeStruct((b_pad, units), jnp.float32),
        grid=(n_steps,),
        in_specs=[
            pl.BlockSpec((tile_b, L), lambda i: (i, 0)),        # x (unpadded L)
            pl.BlockSpec((L, u_pad), const2),                   # w1
            pl.BlockSpec((3, u_pad, u_pad), lambda i: (0, 0, 0)),  # w2..w4
            pl.BlockSpec((4, u_pad), const2),                   # b1..b4
        ],
        out_specs=pl.BlockSpec((tile_b, units), lambda i: (i, 0)),
        compiler_params=pltpu.CompilerParams(
            dimension_semantics=("parallel",),
            vmem_limit_bytes=vmem_limit),
    )(x, w1, wmid, b_all)

    return out if b_pad == B else out[:B]


def block_forward(x, prepped, *, tile_b_max=512):
    """Block.forward(x) given prepared (packed/padded/transposed) params."""
    w1, wmid, b_all = prepped["arrays"]
    return _block_forward_impl(x, w1, wmid, b_all,
                               units=prepped["units"], tile_b_max=tile_b_max)


def init_block_params(key, backcast_length, units, thetas_dim):
    """Deterministic synthetic parameters matching Block.__init__ shapes
    (PyTorch nn.Linear convention: weight is (out, in))."""
    ks = jax.random.split(key, 10)
    return {
        "w1": jax.random.normal(ks[0], (units, backcast_length), jnp.float32) * 0.1,
        "b1": jax.random.normal(ks[1], (units,), jnp.float32) * 0.1,
        "w2": jax.random.normal(ks[2], (units, units), jnp.float32) * 0.1,
        "b2": jax.random.normal(ks[3], (units,), jnp.float32) * 0.1,
        "w3": jax.random.normal(ks[4], (units, units), jnp.float32) * 0.1,
        "b3": jax.random.normal(ks[5], (units,), jnp.float32) * 0.1,
        "w4": jax.random.normal(ks[6], (units, units), jnp.float32) * 0.1,
        "b4": jax.random.normal(ks[7], (units,), jnp.float32) * 0.1,
        # theta_b_fc / theta_f_fc: declared in __init__ but unused in forward().
        "theta_b_w": jax.random.normal(ks[8], (thetas_dim, units), jnp.float32) * 0.1,
        "theta_f_w": jax.random.normal(ks[9], (thetas_dim, units), jnp.float32) * 0.1,
    }


def block_forward_ref(x, params):
    """Pure-JAX reference for correctness checking."""
    x = squeeze_last_dim(x).astype(jnp.float32)
    h = jnp.maximum(x @ params["w1"].T + params["b1"], 0.0)
    h = jnp.maximum(h @ params["w2"].T + params["b2"], 0.0)
    h = jnp.maximum(h @ params["w3"].T + params["b3"], 0.0)
    h = jnp.maximum(h @ params["w4"].T + params["b4"], 0.0)
    return h


if __name__ == "__main__":
    batch = 8
    backcast_length = 10
    forecast_length = 5  # unused in forward(), kept for spec fidelity
    units = 32
    thetas_dim = 4

    key = jax.random.PRNGKey(0)
    k_x, k_x2, k_p = jax.random.split(key, 3)

    params = init_block_params(k_p, backcast_length, units, thetas_dim)

    # --- f32-weight path, toy batch (input arrives as (B, L, 1) like PyTorch)
    x = jax.random.normal(k_x, (batch, backcast_length, 1), jnp.float32)
    prepped_f32 = prepare_block_params(params, compute_dtype=jnp.float32)
    out = jax.block_until_ready(block_forward(x, prepped_f32))
    ref = block_forward_ref(x, params)
    assert out.shape == (batch, units)
    assert jnp.allclose(out, ref, atol=1e-4, rtol=1e-4), "f32 mismatch vs ref"

    # --- f32-weight path, non-tile-aligned batch exercising the multi-step
    #     grid (>=2 steps for v7x megacore) and minimal batch padding.
    batch2 = 300
    x2 = jax.random.normal(k_x2, (batch2, backcast_length), jnp.float32)
    out2 = jax.block_until_ready(block_forward(x2, prepped_f32))
    ref2 = block_forward_ref(x2, params)
    assert out2.shape == (batch2, units)
    assert jnp.allclose(out2, ref2, atol=1e-4, rtol=1e-4), "grid mismatch vs ref"

    # --- default bf16-weight path (v6e/v7x MXU fast path); f32 accumulate /
    #     epilogue keeps it safe on v5e too.
    prepped_bf16 = prepare_block_params(params)           # bf16 is the default
    out_bf16 = jax.block_until_ready(block_forward(x, prepped_bf16))
    assert out_bf16.shape == (batch, units)
    assert jnp.allclose(out_bf16, ref, atol=5e-2, rtol=5e-2), "bf16 mismatch"

    print("KERNEL_OK")
</pallas_src>

<mosaic_0001>
module attributes {stable_mosaic.version = 11 : i64} {
  func.func @block_kernel(%arg0: i32, %arg1: memref<8x10xf32, #tpu.memory_space<vmem>>, %arg2: memref<10x128xf32, #tpu.memory_space<vmem>>, %arg3: memref<3x128x128xf32, #tpu.memory_space<vmem>>, %arg4: memref<4x128xf32, #tpu.memory_space<vmem>>, %arg5: memref<8x32xf32, #tpu.memory_space<vmem>>) attributes {dimension_semantics = [#tpu.dimension_semantics<parallel>], iteration_bounds = array<i64: 1>, scalar_prefetch = 0 : i64, scratch_operands = 0 : i64, tpu.core_type = #tpu.core_type<tc>, window_params = [{transform_indices = @transform_0, window_bounds = array<i64: 8, 10>}, {pipeline_mode = #tpu.pipeline_mode<synchronous>, transform_indices = @transform_1, window_bounds = array<i64: 10, 128>}, {pipeline_mode = #tpu.pipeline_mode<synchronous>, transform_indices = @transform_2, window_bounds = array<i64: 3, 128, 128>}, {pipeline_mode = #tpu.pipeline_mode<synchronous>, transform_indices = @transform_3, window_bounds = array<i64: 4, 128>}, {transform_indices = @transform_4, window_bounds = array<i64: 8, 32>}]} {
    %c0 = arith.constant 0 : index
    %c0_0 = arith.constant 0 : index
    %0 = vector.load %arg4[%c0, %c0_0] : memref<4x128xf32, #tpu.memory_space<vmem>>, vector<4x128xf32>
    %c0_1 = arith.constant 0 : index
    %c0_2 = arith.constant 0 : index
    %1 = vector.load %arg1[%c0_1, %c0_2] : memref<8x10xf32, #tpu.memory_space<vmem>>, vector<8x10xf32>
    %c0_3 = arith.constant 0 : index
    %c0_4 = arith.constant 0 : index
    %2 = vector.load %arg2[%c0_3, %c0_4] : memref<10x128xf32, #tpu.memory_space<vmem>>, vector<10x128xf32>
    %cst = arith.constant dense<0.000000e+00> : vector<8x128xf32>
    %3 = tpu.matmul %1, %2, %cst {dimension_numbers = #tpu.dot_dimension_numbers<[1], [0], [0], [1], [0, 0, 1, 1], [], []>} : vector<8x10xf32>, vector<10x128xf32>, vector<8x128xf32> -> vector<8x128xf32>
    %4 = vector.extract_strided_slice %0 {offsets = [0, 0], sizes = [1, 128], strides = [1, 1]} : vector<4x128xf32> to vector<1x128xf32>
    %5 = vector.broadcast %4 : vector<1x128xf32> to vector<8x128xf32>
    %6 = arith.addf %3, %5 : vector<8x128xf32>
    %cst_5 = arith.constant 0.000000e+00 : f32
    %7 = vector.broadcast %cst_5 : f32 to vector<8x128xf32>
    %8 = arith.maximumf %6, %7 : vector<8x128xf32>
    %c0_6 = arith.constant 0 : index
    %c0_7 = arith.constant 0 : index
    %c0_8 = arith.constant 0 : index
    %9 = vector.load %arg3[%c0_6, %c0_7, %c0_8] : memref<3x128x128xf32, #tpu.memory_space<vmem>>, vector<1x128x128xf32>
    %10 = vector.shape_cast %9 : vector<1x128x128xf32> to vector<128x128xf32>
    %cst_9 = arith.constant dense<0.000000e+00> : vector<8x128xf32>
    %11 = tpu.matmul %8, %10, %cst_9 {dimension_numbers = #tpu.dot_dimension_numbers<[1], [0], [0], [1], [0, 0, 1, 1], [], []>} : vector<8x128xf32>, vector<128x128xf32>, vector<8x128xf32> -> vector<8x128xf32>
    %12 = vector.extract_strided_slice %0 {offsets = [1, 0], sizes = [1, 128], strides = [1, 1]} : vector<4x128xf32> to vector<1x128xf32>
    %13 = vector.broadcast %12 : vector<1x128xf32> to vector<8x128xf32>
    %14 = arith.addf %11, %13 : vector<8x128xf32>
    %cst_10 = arith.constant 0.000000e+00 : f32
    %15 = vector.broadcast %cst_10 : f32 to vector<8x128xf32>
    %16 = arith.maximumf %14, %15 : vector<8x128xf32>
    %c1 = arith.constant 1 : index
    %c0_11 = arith.constant 0 : index
    %c0_12 = arith.constant 0 : index
    %17 = vector.load %arg3[%c1, %c0_11, %c0_12] : memref<3x128x128xf32, #tpu.memory_space<vmem>>, vector<1x128x128xf32>
    %18 = vector.shape_cast %17 : vector<1x128x128xf32> to vector<128x128xf32>
    %cst_13 = arith.constant dense<0.000000e+00> : vector<8x128xf32>
    %19 = tpu.matmul %16, %18, %cst_13 {dimension_numbers = #tpu.dot_dimension_numbers<[1], [0], [0], [1], [0, 0, 1, 1], [], []>} : vector<8x128xf32>, vector<128x128xf32>, vector<8x128xf32> -> vector<8x128xf32>
    %20 = vector.extract_strided_slice %0 {offsets = [2, 0], sizes = [1, 128], strides = [1, 1]} : vector<4x128xf32> to vector<1x128xf32>
    %21 = vector.broadcast %20 : vector<1x128xf32> to vector<8x128xf32>
    %22 = arith.addf %19, %21 : vector<8x128xf32>
    %cst_14 = arith.constant 0.000000e+00 : f32
    %23 = vector.broadcast %cst_14 : f32 to vector<8x128xf32>
    %24 = arith.maximumf %22, %23 : vector<8x128xf32>
    %c2 = arith.constant 2 : index
    %c0_15 = arith.constant 0 : index
    %c0_16 = arith.constant 0 : index
    %25 = vector.load %arg3[%c2, %c0_15, %c0_16] : memref<3x128x128xf32, #tpu.memory_space<vmem>>, vector<1x128x128xf32>
    %26 = vector.shape_cast %25 : vector<1x128x128xf32> to vector<128x128xf32>
    %cst_17 = arith.constant dense<0.000000e+00> : vector<8x128xf32>
    %27 = tpu.matmul %24, %26, %cst_17 {dimension_numbers = #tpu.dot_dimension_numbers<[1], [0], [0], [1], [0, 0, 1, 1], [], []>} : vector<8x128xf32>, vector<128x128xf32>, vector<8x128xf32> -> vector<8x128xf32>
    %28 = vector.extract_strided_slice %0 {offsets = [3, 0], sizes = [1, 128], strides = [1, 1]} : vector<4x128xf32> to vector<1x128xf32>
    %29 = vector.broadcast %28 : vector<1x128xf32> to vector<8x128xf32>
    %30 = arith.addf %27, %29 : vector<8x128xf32>
    %cst_18 = arith.constant 0.000000e+00 : f32
    %31 = vector.broadcast %cst_18 : f32 to vector<8x128xf32>
    %32 = arith.maximumf %30, %31 : vector<8x128xf32>
    %33 = vector.extract_strided_slice %32 {offsets = [0, 0], sizes = [8, 32], strides = [1, 1]} : vector<8x128xf32> to vector<8x32xf32>
    %c0_19 = arith.constant 0 : index
    %c0_20 = arith.constant 0 : index
    %34 = vector.load %arg5[%c0_19, %c0_20] : memref<8x32xf32, #tpu.memory_space<vmem>>, vector<8x32xf32>
    tpu.vector_store %arg5[%c0_19, %c0_20], %33 {strides = array<i32>} : memref<8x32xf32, #tpu.memory_space<vmem>>, vector<8x32xf32>,
    return
  }
  func.func @transform_0(%arg0: i32) -> (i32, i32) {
    %c0_i32 = arith.constant 0 : i32
    %c0_i32_0 = arith.constant 0 : i32
    return %arg0, %c0_i32 : i32, i32
  }
  func.func @transform_1(%arg0: i32) -> (i32, i32) {
    %c0_i32 = arith.constant 0 : i32
    %c0_i32_0 = arith.constant 0 : i32
    %c0_i32_1 = arith.constant 0 : i32
    return %c0_i32, %c0_i32_0 : i32, i32
  }
  func.func @transform_2(%arg0: i32) -> (i32, i32, i32) {
    %c0_i32 = arith.constant 0 : i32
    %c0_i32_0 = arith.constant 0 : i32
    %c0_i32_1 = arith.constant 0 : i32
    %c0_i32_2 = arith.constant 0 : i32
    return %c0_i32, %c0_i32_0, %c0_i32_1 : i32, i32, i32
  }
  func.func @transform_3(%arg0: i32) -> (i32, i32) {
    %c0_i32 = arith.constant 0 : i32
    %c0_i32_0 = arith.constant 0 : i32
    %c0_i32_1 = arith.constant 0 : i32
    return %c0_i32, %c0_i32_0 : i32, i32
  }
  func.func @transform_4(%arg0: i32) -> (i32, i32) {
    %c0_i32 = arith.constant 0 : i32
    %c0_i32_0 = arith.constant 0 : i32
    return %arg0, %c0_i32 : i32, i32
  }
}

</mosaic_0001>

<llo_original>
// kernel: _block_forward_impl.1
$region0: #{_block_forward_impl.1}
  #allocation0 [shape = 'u32[]', space=smem, size = 0x4, offset = 0x4, fixed_abs, tag = 'smem constant byte address 0x4 - core index']
  #allocation1 [shape = 'u32[144,128]{1,0:T(1,128)}', space=vmem, size = 0x12000, scoped, tag = 'internal scratch']
  %s0 = inlined_call_operand.hbm [shape: f32[8,10], index: 0, kind: input, shape index: {}]
  %s1 = inlined_call_operand.hbm [shape: f32[10,128], index: 1, kind: input, shape index: {}]
  %s2 = inlined_call_operand.hbm [shape: f32[3,128,128], index: 2, kind: input, shape index: {}]
  %s3 = inlined_call_operand.vmem [shape: f32[4,128], index: 3, kind: input, shape index: {}]
  %s4 = inlined_call_operand.hbm [shape: f32[8,32], index: 4, kind: output, shape index: {}]
  %s5 = sld [smem:[#allocation0]]
  $region38: #{_block_forward_impl.1} parent=0
    _
  %s7 = ssub.s32 1, %s5
  %s8 = scalar_select 0, %s7, %s5
  $region1: #{_block_forward_impl.1} parent=0
    #allocation2 [shape = 'u8[4096]{0}', space=vmem, size = 0x1000, scoped, tag = 'input window, operand 0, single buffered']
    #allocation3 [shape = 's32[1]{0}', space=sflag, size = 0x4, scoped, tag = 'scoped memory for _block_forward_impl.1']
    #allocation4 [shape = 's32[1]{0}', space=sflag, size = 0x4, scoped, tag = 'scoped memory for _block_forward_impl.1']
    #allocation5 [shape = 'u8[8192]{0}', space=vmem, size = 0x2000, scoped, tag = 'input window, operand 1, single buffered']
    #allocation6 [shape = 's32[1]{0}', space=sflag, size = 0x4, scoped, tag = 'scoped memory for _block_forward_impl.1']
    #allocation7 [shape = 'u8[196608]{0}', space=vmem, size = 0x30000, scoped, tag = 'input window, operand 2, single buffered']
    #allocation8 [shape = 'u8[4096]{0}', space=vmem, size = 0x1000, scoped, tag = 'output window, operand 0, single buffered']
    %9 = vsyncpa [#allocation3], 0
    %10 = vsyncpa [#allocation6], 0
    %11 = vsyncpa [#allocation4], 0
    // Predicated region
    $region2: #{_block_forward_impl.1} parent=1 // pred_check
      _
    $region3: #{_block_forward_impl.1} parent=1 // pred_check_branch
      %13 = sbr.rel (0) target = $region5
    $region4: #{_block_forward_impl.1} parent=1 // pred_region
      %s15 = ssub.s32 128, 128
      %16 = vsyncadd [#allocation3], %s15
      %s18 = sshll.u32 [#allocation2], 4
      %s19 = int_to_ptr.vmem [resolvable:$true] %s18
      %21 = dma.hbm_to_vmem [thread:$0]  %s0, 128, %s19, [#allocation3]
    $region5: #{_block_forward_impl.1} parent=1 // pred_fallthru
      _
    // Predicated region
    $region6: #{_block_forward_impl.1} parent=1 // pred_check
      _
    $region7: #{_block_forward_impl.1} parent=1 // pred_check_branch
      %23 = sbr.rel (0) target = $region9
    $region8: #{_block_forward_impl.1} parent=1 // pred_region
      %s25 = ssub.s32 256, 256
      %26 = vsyncadd [#allocation6], %s25
      %s27 = sshll.u32 [#allocation5], 4
      %s28 = int_to_ptr.vmem [resolvable:$true] %s27
      %33 = dma.hbm_to_vmem [thread:$0]  %s1, 256, %s28, [#allocation6], 128, 128, 8
    $region9: #{_block_forward_impl.1} parent=1 // pred_fallthru
      _
    // Predicated region
    $region10: #{_block_forward_impl.1} parent=1 // pred_check
      _
    $region11: #{_block_forward_impl.1} parent=1 // pred_check_branch
      %35 = sbr.rel (0) target = $region13
    $region12: #{_block_forward_impl.1} parent=1 // pred_region
      %s37 = ssub.s32 6144, 6144
      %38 = vsyncadd [#allocation6], %s37
      %s39 = sshll.u32 [#allocation7], 4
      %s40 = int_to_ptr.vmem [resolvable:$true] %s39
      %45 = dma.hbm_to_vmem [thread:$0]  %s2, 6144, %s40, [#allocation6], 128, 128, 8
    $region13: #{_block_forward_impl.1} parent=1 // pred_fallthru
      _
    // Predicated region
    $region14: #{_block_forward_impl.1} parent=1 // pred_check
      _
    $region15: #{_block_forward_impl.1} parent=1 // pred_check_branch
      %47 = sbr.rel (0) target = $region17
    $region16: #{_block_forward_impl.1} parent=1 // pred_region
      _
    $region17: #{_block_forward_impl.1} parent=1 // pred_fallthru
      _
    // Predicated region
    $region18: #{_block_forward_impl.1} parent=1 // pred_check
      _
    $region19: #{_block_forward_impl.1} parent=1 // pred_check_branch
      %49 = sbr.rel (0) target = $region21
    $region20: #{_block_forward_impl.1} parent=1 // pred_region
      %50 = dma.done [#allocation3], 128
    $region21: #{_block_forward_impl.1} parent=1 // pred_fallthru
      _
    // Predicated region
    $region22: #{_block_forward_impl.1} parent=1 // pred_check
      _
    $region23: #{_block_forward_impl.1} parent=1 // pred_check_branch
      %52 = sbr.rel (0) target = $region25
    $region24: #{_block_forward_impl.1} parent=1 // pred_region
      %53 = dma.done [#allocation6], 256
    $region25: #{_block_forward_impl.1} parent=1 // pred_fallthru
      _
    // Predicated region
    $region26: #{_block_forward_impl.1} parent=1 // pred_check
      _
    $region27: #{_block_forward_impl.1} parent=1 // pred_check_branch
      %55 = sbr.rel (0) target = $region29
    $region28: #{_block_forward_impl.1} parent=1 // pred_region
      %56 = dma.done [#allocation6], 6144
    $region29: #{_block_forward_impl.1} parent=1 // pred_fallthru
      _
    %v57 = vld [vmem:[%s3] sm:$0xf]
    %v58 = vld [vmem:[#allocation2] sm:$0xff]
    %v59 = vld [vmem:[#allocation5] sm:$0xff]
    %v60 = vld [vmem:[#allocation5 + $0x8] sm:$0x3]
    %v61 = vlaneseq
    %v62 = vshrl.u32 %v61, 7
    %v63 = vsub.s32 0, %v62
    %v64 = vrot.slane %v57, %v63
    %vm65 = vcmask 80896
    %v67 = vsel %vm65, %v58, 0
    %vm69 = vcmask 1041408
    %v71 = vsel %vm69, %v60, 0
    %73 = vmatprep.subr.mxu0 0.0
    %74 = vmatpush1.msra.mxu0 %v59
    %75 = vmatprep.subr.mxu0 0.0
    %76 = vmatpush1.msra.mxu0 %v71
    %77 = vmatprep.subr.mxu0 0.0
    %78 = vmatpush1.msra.mxu0 0.0
    %79 = vmatprep.subr.mxu0 0.0
    %80 = vmatpush1.msra.mxu0 0.0
    %81 = vmatprep.subr.mxu0 0.0
    %82 = vmatpush1.msra.mxu0 0.0
    %83 = vmatprep.subr.mxu0 0.0
    %84 = vmatpush1.msra.mxu0 0.0
    %85 = vmatprep.subr.mxu0 0.0
    %86 = vmatpush1.msra.mxu0 0.0
    %87 = vmatprep.subr.mxu0 0.0
    %88 = vmatpush1.msra.mxu0 0.0
    %89 = vmatprep.subr.mxu0 0.0
    %90 = vmatpush1.msra.mxu0 0.0
    %91 = vmatprep.subr.mxu0 0.0
    %92 = vmatpush1.msra.mxu0 0.0
    %93 = vmatprep.subr.mxu0 0.0
    %94 = vmatpush1.msra.mxu0 0.0
    %95 = vmatprep.subr.mxu0 0.0
    %96 = vmatpush1.msra.mxu0 0.0
    %97 = vmatprep.subr.mxu0 0.0
    %98 = vmatpush1.msra.mxu0 0.0
    %99 = vmatprep.subr.mxu0 0.0
    %100 = vmatpush1.msra.mxu0 0.0
    %101 = vmatprep.subr.mxu0 0.0
    %102 = vmatpush1.msra.mxu0 0.0
    %103 = vmatprep.subr.mxu0 0.0
    %104 = vmatpush1.msra.mxu0 0.0
    %105 = vmatprep.subr.mxu0 0.0
    %106 = vmatpush1.msra.mxu0 0.0
    %107 = vmatprep.subr.mxu0 0.0
    %108 = vmatpush1.msra.mxu0 0.0
    %109 = vmatprep.subr.mxu0 0.0
    %110 = vmatpush1.msra.mxu0 0.0
    %111 = vmatprep.subr.mxu0 0.0
    %112 = vmatpush1.msra.mxu0 0.0
    %113 = vmatprep.subr.mxu0 0.0
    %114 = vmatpush1.msra.mxu0 0.0
    %115 = vmatprep.subr.mxu0 0.0
    %116 = vmatpush1.msra.mxu0 0.0
    %117 = vmatprep.subr.mxu0 0.0
    %118 = vmatpush1.msra.mxu0 0.0
    %119 = vmatprep.subr.mxu0 0.0
    %120 = vmatpush1.msra.mxu0 0.0
    %121 = vmatprep.subr.mxu0 0.0
    %122 = vmatpush1.msra.mxu0 0.0
    %123 = vmatprep.subr.mxu0 0.0
    %124 = vmatpush1.msra.mxu0 0.0
    %125 = vmatprep.subr.mxu0 0.0
    %126 = vmatpush1.msra.mxu0 0.0
    %127 = vmatprep.subr.mxu0 0.0
    %128 = vmatpush1.msra.mxu0 0.0
    %129 = vmatprep.subr.mxu0 0.0
    %130 = vmatpush1.msra.mxu0 0.0
    %131 = vmatprep.subr.mxu0 0.0
    %132 = vmatpush1.msra.mxu0 0.0
    %133 = vmatprep.subr.mxu0 0.0
    %134 = vmatpush1.msra.mxu0 0.0
    %135 = vmatprep.subr.mxu0 0.0
    %136 = vmatpush1.msra.mxu0 0.0
    %137 = vmatprep.mubr.f32.mxu0 0.0
    %138 = vmatmul.mubr.f32.gmra.mrb[0].mxu0 %v67
    %v139 = vpop.f32.mrb[0].mxu0
    %v140 = vadd.f32 %v64, %v139
    %v141 = vpop.f32.mrb[0].mxu0
    %142 = vdwg.mxu0
    %v143 = vmax.f32 %v140, 0.0
    %v144 = vld [vmem:[#allocation7] sm:$0xff]
    %v145 = vld [vmem:[#allocation7 + $0x8] sm:$0xff]
    %v146 = vld [vmem:[#allocation7 + $0x10] sm:$0xff]
    %v147 = vld [vmem:[#allocation7 + $0x18] sm:$0xff]
    %v148 = vld [vmem:[#allocation7 + $0x20] sm:$0xff]
    %v149 = vld [vmem:[#allocation7 + $0x28] sm:$0xff]
    %v150 = vld [vmem:[#allocation7 + $0x30] sm:$0xff]
    %v151 = vld [vmem:[#allocation7 + $0x38] sm:$0xff]
    %v152 = vld [vmem:[#allocation7 + $0x40] sm:$0xff]
    %v153 = vld [vmem:[#allocation7 + $0x48] sm:$0xff]
    %v154 = vld [vmem:[#allocation7 + $0x50] sm:$0xff]
    %v155 = vld [vmem:[#allocation7 + $0x58] sm:$0xff]
    %v156 = vld [vmem:[#allocation7 + $0x60] sm:$0xff]
    %v157 = vld [vmem:[#allocation7 + $0x68] sm:$0xff]
    %v158 = vld [vmem:[#allocation7 + $0x70] sm:$0xff]
    %v159 = vld [vmem:[#allocation7 + $0x78] sm:$0xff]
    %v160 = vlaneseq
    %v161 = vshrl.u32 %v160, 7
    %v162 = vsub.s32 1, %v161
    %v163 = vrot.slane %v57, %v162
    %164 = vmatprep.subr.mxu0 0.0
    %165 = vmatpush1.msra.mxu0 %v144
    %166 = vmatprep.subr.mxu0 0.0
    %167 = vmatpush1.msra.mxu0 %v145
    %168 = vmatprep.subr.mxu0 0.0
    %169 = vmatpush1.msra.mxu0 %v146
    %170 = vmatprep.subr.mxu0 0.0
    %171 = vmatpush1.msra.mxu0 %v147
    %172 = vmatprep.subr.mxu0 0.0
    %173 = vmatpush1.msra.mxu0 %v148
    %174 = vmatprep.subr.mxu0 0.0
    %175 = vmatpush1.msra.mxu0 %v149
    %176 = vmatprep.subr.mxu0 0.0
    %177 = vmatpush1.msra.mxu0 %v150
    %178 = vmatprep.subr.mxu0 0.0
    %179 = vmatpush1.msra.mxu0 %v151
    %180 = vmatprep.subr.mxu0 0.0
    %181 = vmatpush1.msra.mxu0 %v152
    %182 = vmatprep.subr.mxu0 0.0
    %183 = vmatpush1.msra.mxu0 %v153
    %184 = vmatprep.subr.mxu0 0.0
    %185 = vmatpush1.msra.mxu0 %v154
    %186 = vmatprep.subr.mxu0 0.0
    %187 = vmatpush1.msra.mxu0 %v155
    %188 = vmatprep.subr.mxu0 0.0
    %189 = vmatpush1.msra.mxu0 %v156
    %190 = vmatprep.subr.mxu0 0.0
    %191 = vmatpush1.msra.mxu0 %v157
    %192 = vmatprep.subr.mxu0 0.0
    %193 = vmatpush1.msra.mxu0 %v158
    %194 = vmatprep.subr.mxu0 0.0
    %195 = vmatpush1.msra.mxu0 %v159
    %196 = vmatprep.subr.mxu0 0.0
    %197 = vmatpush1.msra.mxu0 0.0
    %198 = vmatprep.subr.mxu0 0.0
    %199 = vmatpush1.msra.mxu0 0.0
    %200 = vmatprep.subr.mxu0 0.0
    %201 = vmatpush1.msra.mxu0 0.0
    %202 = vmatprep.subr.mxu0 0.0
    %203 = vmatpush1.msra.mxu0 0.0
    %204 = vmatprep.subr.mxu0 0.0
    %205 = vmatpush1.msra.mxu0 0.0
    %206 = vmatprep.subr.mxu0 0.0
    %207 = vmatpush1.msra.mxu0 0.0
    %208 = vmatprep.subr.mxu0 0.0
    %209 = vmatpush1.msra.mxu0 0.0
    %210 = vmatprep.subr.mxu0 0.0
    %211 = vmatpush1.msra.mxu0 0.0
    %212 = vmatprep.subr.mxu0 0.0
    %213 = vmatpush1.msra.mxu0 0.0
    %214 = vmatprep.subr.mxu0 0.0
    %215 = vmatpush1.msra.mxu0 0.0
    %216 = vmatprep.subr.mxu0 0.0
    %217 = vmatpush1.msra.mxu0 0.0
    %218 = vmatprep.subr.mxu0 0.0
    %219 = vmatpush1.msra.mxu0 0.0
    %220 = vmatprep.subr.mxu0 0.0
    %221 = vmatpush1.msra.mxu0 0.0
    %222 = vmatprep.subr.mxu0 0.0
    %223 = vmatpush1.msra.mxu0 0.0
    %224 = vmatprep.subr.mxu0 0.0
    %225 = vmatpush1.msra.mxu0 0.0
    %226 = vmatprep.subr.mxu0 0.0
    %227 = vmatpush1.msra.mxu0 0.0
    %228 = vmatprep.mubr.f32.mxu0 0.0
    %229 = vmatmul.mubr.f32.gmra.mrb[0].mxu0 %v143
    %v230 = vpop.f32.mrb[0].mxu0
    %v231 = vadd.f32 %v163, %v230
    %v232 = vpop.f32.mrb[0].mxu0
    %233 = vdwg.mxu0
    %v234 = vmax.f32 %v231, 0.0
    %s235 = scalar_lea.vmem [#allocation7], 128
    %v236 = vld [vmem:[%s235] sm:$0xff]
    %v237 = vld [vmem:[%s235 + $0x8] sm:$0xff]
    %v238 = vld [vmem:[%s235 + $0x10] sm:$0xff]
    %v239 = vld [vmem:[%s235 + $0x18] sm:$0xff]
    %v240 = vld [vmem:[%s235 + $0x20] sm:$0xff]
    %v241 = vld [vmem:[%s235 + $0x28] sm:$0xff]
    %v242 = vld [vmem:[%s235 + $0x30] sm:$0xff]
    %v243 = vld [vmem:[%s235 + $0x38] sm:$0xff]
    %v244 = vld [vmem:[%s235 + $0x40] sm:$0xff]
    %v245 = vld [vmem:[%s235 + $0x48] sm:$0xff]
    %v246 = vld [vmem:[%s235 + $0x50] sm:$0xff]
    %v247 = vld [vmem:[%s235 + $0x58] sm:$0xff]
    %v248 = vld [vmem:[%s235 + $0x60] sm:$0xff]
    %v249 = vld [vmem:[%s235 + $0x68] sm:$0xff]
    %v250 = vld [vmem:[%s235 + $0x70] sm:$0xff]
    %v251 = vld [vmem:[%s235 + $0x78] sm:$0xff]
    %v252 = vlaneseq
    %v253 = vshrl.u32 %v252, 7
    %v254 = vsub.s32 2, %v253
    %v255 = vrot.slane %v57, %v254
    %256 = vmatprep.subr.mxu0 0.0
    %257 = vmatpush1.msra.mxu0 %v236
    %258 = vmatprep.subr.mxu0 0.0
    %259 = vmatpush1.msra.mxu0 %v237
    %260 = vmatprep.subr.mxu0 0.0
    %261 = vmatpush1.msra.mxu0 %v238
    %262 = vmatprep.subr.mxu0 0.0
    %263 = vmatpush1.msra.mxu0 %v239
    %264 = vmatprep.subr.mxu0 0.0
    %265 = vmatpush1.msra.mxu0 %v240
    %266 = vmatprep.subr.mxu0 0.0
    %267 = vmatpush1.msra.mxu0 %v241
    %268 = vmatprep.subr.mxu0 0.0
    %269 = vmatpush1.msra.mxu0 %v242
    %270 = vmatprep.subr.mxu0 0.0
    %271 = vmatpush1.msra.mxu0 %v243
    %272 = vmatprep.subr.mxu0 0.0
    %273 = vmatpush1.msra.mxu0 %v244
    %274 = vmatprep.subr.mxu0 0.0
    %275 = vmatpush1.msra.mxu0 %v245
    %276 = vmatprep.subr.mxu0 0.0
    %277 = vmatpush1.msra.mxu0 %v246
    %278 = vmatprep.subr.mxu0 0.0
    %279 = vmatpush1.msra.mxu0 %v247
    %280 = vmatprep.subr.mxu0 0.0
    %281 = vmatpush1.msra.mxu0 %v248
    %282 = vmatprep.subr.mxu0 0.0
    %283 = vmatpush1.msra.mxu0 %v249
    %284 = vmatprep.subr.mxu0 0.0
    %285 = vmatpush1.msra.mxu0 %v250
    %286 = vmatprep.subr.mxu0 0.0
    %287 = vmatpush1.msra.mxu0 %v251
    %288 = vmatprep.subr.mxu0 0.0
    %289 = vmatpush1.msra.mxu0 0.0
    %290 = vmatprep.subr.mxu0 0.0
    %291 = vmatpush1.msra.mxu0 0.0
    %292 = vmatprep.subr.mxu0 0.0
    %293 = vmatpush1.msra.mxu0 0.0
    %294 = vmatprep.subr.mxu0 0.0
    %295 = vmatpush1.msra.mxu0 0.0
    %296 = vmatprep.subr.mxu0 0.0
    %297 = vmatpush1.msra.mxu0 0.0
    %298 = vmatprep.subr.mxu0 0.0
    %299 = vmatpush1.msra.mxu0 0.0
    %300 = vmatprep.subr.mxu0 0.0
    %301 = vmatpush1.msra.mxu0 0.0
    %302 = vmatprep.subr.mxu0 0.0
    %303 = vmatpush1.msra.mxu0 0.0
    %304 = vmatprep.subr.mxu0 0.0
    %305 = vmatpush1.msra.mxu0 0.0
    %306 = vmatprep.subr.mxu0 0.0
    %307 = vmatpush1.msra.mxu0 0.0
    %308 = vmatprep.subr.mxu0 0.0
    %309 = vmatpush1.msra.mxu0 0.0
    %310 = vmatprep.subr.mxu0 0.0
    %311 = vmatpush1.msra.mxu0 0.0
    %312 = vmatprep.subr.mxu0 0.0
    %313 = vmatpush1.msra.mxu0 0.0
    %314 = vmatprep.subr.mxu0 0.0
    %315 = vmatpush1.msra.mxu0 0.0
    %316 = vmatprep.subr.mxu0 0.0
    %317 = vmatpush1.msra.mxu0 0.0
    %318 = vmatprep.subr.mxu0 0.0
    %319 = vmatpush1.msra.mxu0 0.0
    %320 = vmatprep.mubr.f32.mxu0 0.0
    %321 = vmatmul.mubr.f32.gmra.mrb[0].mxu0 %v234
    %v322 = vpop.f32.mrb[0].mxu0
    %v323 = vadd.f32 %v255, %v322
    %v324 = vpop.f32.mrb[0].mxu0
    %325 = vdwg.mxu0
    %v326 = vmax.f32 %v323, 0.0
    %s327 = scalar_lea.vmem [#allocation7], 256
    %v328 = vld [vmem:[%s327] sm:$0xff]
    %v329 = vld [vmem:[%s327 + $0x8] sm:$0xff]
    %v330 = vld [vmem:[%s327 + $0x10] sm:$0xff]
    %v331 = vld [vmem:[%s327 + $0x18] sm:$0xff]
    %v332 = vld [vmem:[%s327 + $0x20] sm:$0xff]
    %v333 = vld [vmem:[%s327 + $0x28] sm:$0xff]
    %v334 = vld [vmem:[%s327 + $0x30] sm:$0xff]
    %v335 = vld [vmem:[%s327 + $0x38] sm:$0xff]
    %v336 = vld [vmem:[%s327 + $0x40] sm:$0xff]
    %v337 = vld [vmem:[%s327 + $0x48] sm:$0xff]
    %v338 = vld [vmem:[%s327 + $0x50] sm:$0xff]
    %v339 = vld [vmem:[%s327 + $0x58] sm:$0xff]
    %v340 = vld [vmem:[%s327 + $0x60] sm:$0xff]
    %v341 = vld [vmem:[%s327 + $0x68] sm:$0xff]
    %v342 = vld [vmem:[%s327 + $0x70] sm:$0xff]
    %v343 = vld [vmem:[%s327 + $0x78] sm:$0xff]
    %v344 = vlaneseq
    %v345 = vshrl.u32 %v344, 7
    %v346 = vsub.s32 3, %v345
    %v347 = vrot.slane %v57, %v346
    %348 = vmatprep.subr.mxu0 0.0
    %349 = vmatpush1.msra.mxu0 %v328
    %350 = vmatprep.subr.mxu0 0.0
    %351 = vmatpush1.msra.mxu0 %v329
    %352 = vmatprep.subr.mxu0 0.0
    %353 = vmatpush1.msra.mxu0 %v330
    %354 = vmatprep.subr.mxu0 0.0
    %355 = vmatpush1.msra.mxu0 %v331
    %356 = vmatprep.subr.mxu0 0.0
    %357 = vmatpush1.msra.mxu0 %v332
    %358 = vmatprep.subr.mxu0 0.0
    %359 = vmatpush1.msra.mxu0 %v333
    %360 = vmatprep.subr.mxu0 0.0
    %361 = vmatpush1.msra.mxu0 %v334
    %362 = vmatprep.subr.mxu0 0.0
    %363 = vmatpush1.msra.mxu0 %v335
    %364 = vmatprep.subr.mxu0 0.0
    %365 = vmatpush1.msra.mxu0 %v336
    %366 = vmatprep.subr.mxu0 0.0
    %367 = vmatpush1.msra.mxu0 %v337
    %368 = vmatprep.subr.mxu0 0.0
    %369 = vmatpush1.msra.mxu0 %v338
    %370 = vmatprep.subr.mxu0 0.0
    %371 = vmatpush1.msra.mxu0 %v339
    %372 = vmatprep.subr.mxu0 0.0
    %373 = vmatpush1.msra.mxu0 %v340
    %374 = vmatprep.subr.mxu0 0.0
    %375 = vmatpush1.msra.mxu0 %v341
    %376 = vmatprep.subr.mxu0 0.0
    %377 = vmatpush1.msra.mxu0 %v342
    %378 = vmatprep.subr.mxu0 0.0
    %379 = vmatpush1.msra.mxu0 %v343
    %380 = vmatprep.subr.mxu0 0.0
    %381 = vmatpush1.msra.mxu0 0.0
    %382 = vmatprep.subr.mxu0 0.0
    %383 = vmatpush1.msra.mxu0 0.0
    %384 = vmatprep.subr.mxu0 0.0
    %385 = vmatpush1.msra.mxu0 0.0
    %386 = vmatprep.subr.mxu0 0.0
    %387 = vmatpush1.msra.mxu0 0.0
    %388 = vmatprep.subr.mxu0 0.0
    %389 = vmatpush1.msra.mxu0 0.0
    %390 = vmatprep.subr.mxu0 0.0
    %391 = vmatpush1.msra.mxu0 0.0
    %392 = vmatprep.subr.mxu0 0.0
    %393 = vmatpush1.msra.mxu0 0.0
    %394 = vmatprep.subr.mxu0 0.0
    %395 = vmatpush1.msra.mxu0 0.0
    %396 = vmatprep.subr.mxu0 0.0
    %397 = vmatpush1.msra.mxu0 0.0
    %398 = vmatprep.subr.mxu0 0.0
    %399 = vmatpush1.msra.mxu0 0.0
    %400 = vmatprep.subr.mxu0 0.0
    %401 = vmatpush1.msra.mxu0 0.0
    %402 = vmatprep.subr.mxu0 0.0
    %403 = vmatpush1.msra.mxu0 0.0
    %404 = vmatprep.subr.mxu0 0.0
    %405 = vmatpush1.msra.mxu0 0.0
    %406 = vmatprep.subr.mxu0 0.0
    %407 = vmatpush1.msra.mxu0 0.0
    %408 = vmatprep.subr.mxu0 0.0
    %409 = vmatpush1.msra.mxu0 0.0
    %410 = vmatprep.subr.mxu0 0.0
    %411 = vmatpush1.msra.mxu0 0.0
    %412 = vmatprep.mubr.f32.mxu0 0.0
    %413 = vmatmul.mubr.f32.gmra.mrb[0].mxu0 %v326
    %v414 = vpop.f32.mrb[0].mxu0
    %v415 = vadd.f32 %v347, %v414
    %v416 = vpop.f32.mrb[0].mxu0
    %417 = vdwg.mxu0
    %v418 = vmax.f32 %v415, 0.0
    %vm419 = vcmask 261120
    %420 = vst.msk [vmem:[#allocation8] sm:$0xff] %vm419, %v418
    // Predicated region
    $region30: #{_block_forward_impl.1} parent=1 // pred_check
      _
    $region31: #{_block_forward_impl.1} parent=1 // pred_check_branch
      %422 = sbr.rel (0) target = $region33
    $region32: #{_block_forward_impl.1} parent=1 // pred_region
      %s424 = ssub.s32 128, 128
      %425 = vsyncadd [#allocation4], %s424
      %s427 = sshll.u32 [#allocation8], 4
      %s428 = int_to_ptr.vmem [resolvable:$true] %s427
      %430 = dma.vmem_to_hbm [thread:$0]  %s428, 128, %s4, [#allocation4]
    $region33: #{_block_forward_impl.1} parent=1 // pred_fallthru
      _
    // Predicated region
    $region34: #{_block_forward_impl.1} parent=1 // pred_check
      _
    $region35: #{_block_forward_impl.1} parent=1 // pred_check_branch
      %432 = sbr.rel (0) target = $region37
    $region36: #{_block_forward_impl.1} parent=1 // pred_region
      %433 = dma.done [#allocation4], 128
    $region37: #{_block_forward_impl.1} parent=1 // pred_fallthru
      _
    %434 = vsyncpa [#allocation3], 1
    %435 = vsyncpa [#allocation6], 1
    %436 = vsyncpa [#allocation4], 1

</llo_original>
